<compile_context>
chip_gen: v5e
topology: v5e:2x2
jax: 0.10.0
libtpu: 0.0.40
codegen_flags: <defaults>
</compile_context>

<pallas_src>
import functools

import jax
import jax.numpy as jnp
from jax import lax
from jax.experimental import pallas as pl
from jax.experimental.pallas import tpu as pltpu

SELU_ALPHA = 1.6732632423543772
SELU_SCALE = 1.0507009873554804
LN_EPS = 1e-6


def _round_up(n, m):
    return (n + m - 1) // m * m


def _vmem_capacity_bytes():
    # Physical VMEM per TensorCore; fall back to the smallest (v7x: 64 MiB).
    try:
        return int(pltpu.get_tpu_info().vmem_capacity_bytes)
    except Exception:
        return 64 * 1024 * 1024


def _pwnn_kernel(x_ref, w1_ref, b1_ref, w2_ref, b2_ref, g_ref, beta_ref, o_ref,
                 *, inv_n):
    # x tile: (TM, size_p) in its native dtype (bf16 inputs stay bf16 on the MXU).
    x_in = x_ref[...]

    # fc1: (TM, size_p) @ (size_p, inner_p), f32 accumulation.
    h = jnp.dot(x_in.astype(w1_ref.dtype), w1_ref[...],
                preferred_element_type=jnp.float32) + b1_ref[...]

    # SELU in f32 (exp goes to the EUP slot).
    h = SELU_SCALE * jnp.where(h > 0, h, SELU_ALPHA * (jnp.exp(h) - 1.0))

    # fc2: (TM, inner_p) @ (inner_p, size_p), f32 accumulation.
    y = jnp.dot(h.astype(w2_ref.dtype), w2_ref[...],
                preferred_element_type=jnp.float32) + b2_ref[...]

    # TODO(synk): dropout is identity at inference time; training-mode dropout not applied.

    # Residual add in f32.
    z = y + x_in.astype(jnp.float32)

    # One-pass LayerNorm statistics over the TRUE feature width.
    # Padded lanes of z are exactly zero (zero-padded weights/bias/residual), so
    # lane-sums over the padded width equal sums over the true width.
    s1 = jnp.sum(z, axis=-1, keepdims=True)
    s2 = jnp.sum(z * z, axis=-1, keepdims=True)
    mean = s1 * inv_n
    var = s2 * inv_n - mean * mean
    zn = (z - mean) * lax.rsqrt(var + LN_EPS)

    # gamma/beta are zero in padded lanes, so padded output lanes are zero.
    o_ref[...] = (zn * g_ref[...] + beta_ref[...]).astype(o_ref.dtype)


@functools.partial(jax.jit, static_argnames=("tm",))
def position_wise_nn(x, w1, b1, w2, b2, gamma, beta, *, tm=256):
    """x: (B, S, size). w1: (size, inner). w2: (inner, size). Returns (B, S, size)."""
    B, S, size = x.shape
    inner = w1.shape[1]
    rows = B * S

    # Lane-dense padded widths (multiple of 128).
    size_p = _round_up(size, 128)
    inner_p = _round_up(inner, 128)

    x2d = x.reshape(rows, size)
    x2d = jnp.pad(x2d, ((0, 0), (0, size_p - size)))
    w1p = jnp.pad(w1, ((0, size_p - size), (0, inner_p - inner)))
    w2p = jnp.pad(w2, ((0, inner_p - inner), (0, size_p - size)))
    b1p = jnp.pad(b1.astype(jnp.float32), (0, inner_p - inner)).reshape(1, inner_p)
    b2p = jnp.pad(b2.astype(jnp.float32), (0, size_p - size)).reshape(1, size_p)
    g2d = jnp.pad(gamma.astype(jnp.float32), (0, size_p - size)).reshape(1, size_p)
    beta2d = jnp.pad(beta.astype(jnp.float32), (0, size_p - size)).reshape(1, size_p)

    # Row tile: as large as requested, but no larger than needed for the problem,
    # and a multiple of 8 (f32 sublanes).  For realistic B*S this is 256+ so the
    # MXU M dimension is saturated and grid-step overhead is amortized; it is
    # not grown past `tm` so rows/tm keeps enough grid steps for v7x's 2 TCs.
    tm_eff = _round_up(max(8, min(tm, _round_up(rows, 8))), 8)
    grid = (pl.cdiv(rows, tm_eff),)

    x_bytes = jnp.dtype(x.dtype).itemsize
    w_bytes = jnp.dtype(w1.dtype).itemsize
    # Double-buffered x/out tiles + double-buffered resident weights + small params
    # + f32 in-kernel intermediates (h, z, etc.).
    need = (
        2 * tm_eff * size_p * x_bytes            # x tile (x2 buffers)
        + 2 * tm_eff * size_p * x_bytes          # out tile (x2 buffers)
        + 2 * (size_p * inner_p + inner_p * size_p) * w_bytes
        + 2 * (inner_p + 3 * size_p) * 4
        + 4 * (tm_eff * inner_p + 4 * tm_eff * size_p)
    )
    vmem_cap = _vmem_capacity_bytes()
    vmem_limit = int(min(max(int(need * 1.25) + (4 << 20), 32 << 20),
                         int(vmem_cap * 0.85)))

    kernel = functools.partial(_pwnn_kernel, inv_n=1.0 / float(size))

    out2d = pl.pallas_call(
        kernel,
        out_shape=jax.ShapeDtypeStruct((rows, size_p), x.dtype),
        grid_spec=pltpu.PrefetchScalarGridSpec(
            num_scalar_prefetch=0,
            grid=grid,
            in_specs=[
                pl.BlockSpec((tm_eff, size_p), lambda i: (i, 0)),     # x tile
                pl.BlockSpec((size_p, inner_p), lambda i: (0, 0)),    # W1 (resident)
                pl.BlockSpec((1, inner_p), lambda i: (0, 0)),         # b1
                pl.BlockSpec((inner_p, size_p), lambda i: (0, 0)),    # W2 (resident)
                pl.BlockSpec((1, size_p), lambda i: (0, 0)),          # b2
                pl.BlockSpec((1, size_p), lambda i: (0, 0)),          # gamma
                pl.BlockSpec((1, size_p), lambda i: (0, 0)),          # beta
            ],
            out_specs=pl.BlockSpec((tm_eff, size_p), lambda i: (i, 0)),
        ),
        compiler_params=pltpu.CompilerParams(
            dimension_semantics=("parallel",),
            vmem_limit_bytes=vmem_limit,
        ),
    )(x2d, w1p, b1p, w2p, b2p, g2d, beta2d)

    return out2d[:, :size].reshape(B, S, size)


def _reference(x, w1, b1, w2, b2, gamma, beta):
    xf = x.astype(jnp.float32)
    h = xf @ w1 + b1
    h = SELU_SCALE * jnp.where(h > 0, h, SELU_ALPHA * (jnp.exp(h) - 1.0))
    y = h @ w2 + b2
    z = y + xf
    mean = jnp.mean(z, axis=-1, keepdims=True)
    var = jnp.mean((z - mean) ** 2, axis=-1, keepdims=True)
    zn = (z - mean) * lax.rsqrt(var + LN_EPS)
    return (zn * gamma + beta).astype(x.dtype)


if __name__ == "__main__":
    B, S, SIZE, INNER = 2, 8, 32, 64

    key = jax.random.PRNGKey(0)
    kx, kw1, kb1, kw2, kb2 = jax.random.split(key, 5)

    x = jax.random.normal(kx, (B, S, SIZE), dtype=jnp.float32)

    # Deterministic parameter init (PyTorch Linear-style uniform bounds).
    bound1 = 1.0 / (SIZE ** 0.5)
    bound2 = 1.0 / (INNER ** 0.5)
    w1 = jax.random.uniform(kw1, (SIZE, INNER), minval=-bound1, maxval=bound1, dtype=jnp.float32)
    b1 = jax.random.uniform(kb1, (INNER,), minval=-bound1, maxval=bound1, dtype=jnp.float32)
    w2 = jax.random.uniform(kw2, (INNER, SIZE), minval=-bound2, maxval=bound2, dtype=jnp.float32)
    b2 = jax.random.uniform(kb2, (SIZE,), minval=-bound2, maxval=bound2, dtype=jnp.float32)
    gamma = jnp.ones((SIZE,), dtype=jnp.float32)   # LayerNorm weight default
    beta = jnp.zeros((SIZE,), dtype=jnp.float32)   # LayerNorm bias default

    out = position_wise_nn(x, w1, b1, w2, b2, gamma, beta)
    out = jax.block_until_ready(out)

    ref = _reference(x, w1, b1, w2, b2, gamma, beta)
    assert out.shape == (B, S, SIZE)
    assert jnp.allclose(out, ref, atol=1e-4, rtol=1e-4)

    print("KERNEL_OK")
</pallas_src>

<mosaic_0001>
module attributes {stable_mosaic.version = 11 : i64} {
  func.func @_pwnn_kernel(%arg0: i32, %arg1: memref<16x128xf32, #tpu.memory_space<vmem>>, %arg2: memref<128x128xf32, #tpu.memory_space<vmem>>, %arg3: memref<1x128xf32, #tpu.memory_space<vmem>>, %arg4: memref<128x128xf32, #tpu.memory_space<vmem>>, %arg5: memref<1x128xf32, #tpu.memory_space<vmem>>, %arg6: memref<1x128xf32, #tpu.memory_space<vmem>>, %arg7: memref<1x128xf32, #tpu.memory_space<vmem>>, %arg8: memref<16x128xf32, #tpu.memory_space<vmem>>) attributes {dimension_semantics = [#tpu.dimension_semantics<parallel>], iteration_bounds = array<i64: 1>, scalar_prefetch = 0 : i64, scratch_operands = 0 : i64, tpu.core_type = #tpu.core_type<tc>, window_params = [{transform_indices = @transform_0, window_bounds = array<i64: 16, 128>}, {pipeline_mode = #tpu.pipeline_mode<synchronous>, transform_indices = @transform_1, window_bounds = array<i64: 128, 128>}, {pipeline_mode = #tpu.pipeline_mode<synchronous>, transform_indices = @transform_2, window_bounds = array<i64: 1, 128>}, {pipeline_mode = #tpu.pipeline_mode<synchronous>, transform_indices = @transform_3, window_bounds = array<i64: 128, 128>}, {pipeline_mode = #tpu.pipeline_mode<synchronous>, transform_indices = @transform_4, window_bounds = array<i64: 1, 128>}, {pipeline_mode = #tpu.pipeline_mode<synchronous>, transform_indices = @transform_5, window_bounds = array<i64: 1, 128>}, {pipeline_mode = #tpu.pipeline_mode<synchronous>, transform_indices = @transform_6, window_bounds = array<i64: 1, 128>}, {transform_indices = @transform_7, window_bounds = array<i64: 16, 128>}]} {
    %c0 = arith.constant 0 : index
    %c0_0 = arith.constant 0 : index
    %0 = vector.load %arg1[%c0, %c0_0] : memref<16x128xf32, #tpu.memory_space<vmem>>, vector<16x128xf32>
    %c0_1 = arith.constant 0 : index
    %c0_2 = arith.constant 0 : index
    %1 = vector.load %arg2[%c0_1, %c0_2] : memref<128x128xf32, #tpu.memory_space<vmem>>, vector<128x128xf32>
    %cst = arith.constant dense<0.000000e+00> : vector<16x128xf32>
    %2 = tpu.matmul %0, %1, %cst {dimension_numbers = #tpu.dot_dimension_numbers<[1], [0], [0], [1], [0, 0, 1, 1], [], []>} : vector<16x128xf32>, vector<128x128xf32>, vector<16x128xf32> -> vector<16x128xf32>
    %c0_3 = arith.constant 0 : index
    %c0_4 = arith.constant 0 : index
    %3 = vector.load %arg3[%c0_3, %c0_4] : memref<1x128xf32, #tpu.memory_space<vmem>>, vector<1x128xf32>
    %4 = vector.broadcast %3 : vector<1x128xf32> to vector<16x128xf32>
    %5 = arith.addf %2, %4 : vector<16x128xf32>
    %cst_5 = arith.constant 0.000000e+00 : f32
    %6 = vector.broadcast %cst_5 : f32 to vector<16x128xf32>
    %7 = arith.cmpf ogt, %5, %6 : vector<16x128xf32>
    %8 = math.exp %5 : vector<16x128xf32>
    %cst_6 = arith.constant 1.000000e+00 : f32
    %9 = vector.broadcast %cst_6 : f32 to vector<16x128xf32>
    %10 = arith.subf %8, %9 : vector<16x128xf32>
    %cst_7 = arith.constant 1.67326319 : f32
    %11 = vector.broadcast %cst_7 : f32 to vector<16x128xf32>
    %12 = arith.mulf %11, %10 : vector<16x128xf32>
    %13 = arith.select %7, %5, %12 : vector<16x128xi1>, vector<16x128xf32>
    %cst_8 = arith.constant 1.05070102 : f32
    %14 = vector.broadcast %cst_8 : f32 to vector<16x128xf32>
    %15 = arith.mulf %14, %13 : vector<16x128xf32>
    %c0_9 = arith.constant 0 : index
    %c0_10 = arith.constant 0 : index
    %16 = vector.load %arg4[%c0_9, %c0_10] : memref<128x128xf32, #tpu.memory_space<vmem>>, vector<128x128xf32>
    %cst_11 = arith.constant dense<0.000000e+00> : vector<16x128xf32>
    %17 = tpu.matmul %15, %16, %cst_11 {dimension_numbers = #tpu.dot_dimension_numbers<[1], [0], [0], [1], [0, 0, 1, 1], [], []>} : vector<16x128xf32>, vector<128x128xf32>, vector<16x128xf32> -> vector<16x128xf32>
    %c0_12 = arith.constant 0 : index
    %c0_13 = arith.constant 0 : index
    %18 = vector.load %arg5[%c0_12, %c0_13] : memref<1x128xf32, #tpu.memory_space<vmem>>, vector<1x128xf32>
    %19 = vector.broadcast %18 : vector<1x128xf32> to vector<16x128xf32>
    %20 = arith.addf %17, %19 : vector<16x128xf32>
    %21 = arith.addf %20, %0 : vector<16x128xf32>
    %cst_14 = arith.constant dense<0.000000e+00> : vector<16xf32>
    %22 = vector.multi_reduction <add>, %21, %cst_14 [1] : vector<16x128xf32> to vector<16xf32>
    %23 = vector.shape_cast %22 : vector<16xf32> to vector<16x1xf32>
    %24 = arith.mulf %21, %21 : vector<16x128xf32>
    %cst_15 = arith.constant dense<0.000000e+00> : vector<16xf32>
    %25 = vector.multi_reduction <add>, %24, %cst_15 [1] : vector<16x128xf32> to vector<16xf32>
    %26 = vector.shape_cast %25 : vector<16xf32> to vector<16x1xf32>
    %cst_16 = arith.constant 3.125000e-02 : f32
    %27 = vector.broadcast %cst_16 : f32 to vector<16x1xf32>
    %28 = arith.mulf %23, %27 : vector<16x1xf32>
    %cst_17 = arith.constant 3.125000e-02 : f32
    %29 = vector.broadcast %cst_17 : f32 to vector<16x1xf32>
    %30 = arith.mulf %26, %29 : vector<16x1xf32>
    %31 = arith.mulf %28, %28 : vector<16x1xf32>
    %32 = arith.subf %30, %31 : vector<16x1xf32>
    %33 = vector.broadcast %28 : vector<16x1xf32> to vector<16x128xf32>
    %34 = arith.subf %21, %33 : vector<16x128xf32>
    %cst_18 = arith.constant 9.99999997E-7 : f32
    %35 = vector.broadcast %cst_18 : f32 to vector<16x1xf32>
    %36 = arith.addf %32, %35 : vector<16x1xf32>
    %37 = math.rsqrt %36 : vector<16x1xf32>
    %38 = vector.broadcast %37 : vector<16x1xf32> to vector<16x128xf32>
    %39 = arith.mulf %34, %38 : vector<16x128xf32>
    %c0_19 = arith.constant 0 : index
    %c0_20 = arith.constant 0 : index
    %40 = vector.load %arg6[%c0_19, %c0_20] : memref<1x128xf32, #tpu.memory_space<vmem>>, vector<1x128xf32>
    %41 = vector.broadcast %40 : vector<1x128xf32> to vector<16x128xf32>
    %42 = arith.mulf %39, %41 : vector<16x128xf32>
    %c0_21 = arith.constant 0 : index
    %c0_22 = arith.constant 0 : index
    %43 = vector.load %arg7[%c0_21, %c0_22] : memref<1x128xf32, #tpu.memory_space<vmem>>, vector<1x128xf32>
    %44 = vector.broadcast %43 : vector<1x128xf32> to vector<16x128xf32>
    %45 = arith.addf %42, %44 : vector<16x128xf32>
    %c0_23 = arith.constant 0 : index
    %c0_24 = arith.constant 0 : index
    %46 = vector.load %arg8[%c0_23, %c0_24] : memref<16x128xf32, #tpu.memory_space<vmem>>, vector<16x128xf32>
    tpu.vector_store %arg8[%c0_23, %c0_24], %45 {strides = array<i32>} : memref<16x128xf32, #tpu.memory_space<vmem>>, vector<16x128xf32>,
    return
  }
  func.func @transform_0(%arg0: i32) -> (i32, i32) {
    %c0_i32 = arith.constant 0 : i32
    %c0_i32_0 = arith.constant 0 : i32
    return %arg0, %c0_i32 : i32, i32
  }
  func.func @transform_1(%arg0: i32) -> (i32, i32) {
    %c0_i32 = arith.constant 0 : i32
    %c0_i32_0 = arith.constant 0 : i32
    %c0_i32_1 = arith.constant 0 : i32
    return %c0_i32, %c0_i32_0 : i32, i32
  }
  func.func @transform_2(%arg0: i32) -> (i32, i32) {
    %c0_i32 = arith.constant 0 : i32
    %c0_i32_0 = arith.constant 0 : i32
    %c0_i32_1 = arith.constant 0 : i32
    return %c0_i32, %c0_i32_0 : i32, i32
  }
  func.func @transform_3(%arg0: i32) -> (i32, i32) {
    %c0_i32 = arith.constant 0 : i32
    %c0_i32_0 = arith.constant 0 : i32
    %c0_i32_1 = arith.constant 0 : i32
    return %c0_i32, %c0_i32_0 : i32, i32
  }
  func.func @transform_4(%arg0: i32) -> (i32, i32) {
    %c0_i32 = arith.constant 0 : i32
    %c0_i32_0 = arith.constant 0 : i32
    %c0_i32_1 = arith.constant 0 : i32
    return %c0_i32, %c0_i32_0 : i32, i32
  }
  func.func @transform_5(%arg0: i32) -> (i32, i32) {
    %c0_i32 = arith.constant 0 : i32
    %c0_i32_0 = arith.constant 0 : i32
    %c0_i32_1 = arith.constant 0 : i32
    return %c0_i32, %c0_i32_0 : i32, i32
  }
  func.func @transform_6(%arg0: i32) -> (i32, i32) {
    %c0_i32 = arith.constant 0 : i32
    %c0_i32_0 = arith.constant 0 : i32
    %c0_i32_1 = arith.constant 0 : i32
    return %c0_i32, %c0_i32_0 : i32, i32
  }
  func.func @transform_7(%arg0: i32) -> (i32, i32) {
    %c0_i32 = arith.constant 0 : i32
    %c0_i32_0 = arith.constant 0 : i32
    return %arg0, %c0_i32 : i32, i32
  }
}

</mosaic_0001>

<llo_original>
// kernel: position_wise_nn.1
$region0: #{position_wise_nn.1}
  #allocation0 [shape = 'u32[]', space=smem, size = 0x4, offset = 0x4, fixed_abs, tag = 'smem constant byte address 0x4 - core index']
  #allocation1 [shape = 'u32[72,128]{1,0:T(1,128)}', space=vmem, size = 0x9000, scoped, tag = 'internal scratch']
  %s0 = inlined_call_operand.vmem [shape: f32[16,128], index: 0, kind: input, shape index: {}]
  %s1 = inlined_call_operand.vmem [shape: f32[128,128], index: 1, kind: input, shape index: {}]
  %s2 = inlined_call_operand.vmem [shape: f32[1,128], index: 2, kind: input, shape index: {}]
  %s3 = inlined_call_operand.vmem [shape: f32[128,128], index: 3, kind: input, shape index: {}]
  %s4 = inlined_call_operand.vmem [shape: f32[1,128], index: 4, kind: input, shape index: {}]
  %s5 = inlined_call_operand.vmem [shape: f32[1,128], index: 5, kind: input, shape index: {}]
  %s6 = inlined_call_operand.vmem [shape: f32[1,128], index: 6, kind: input, shape index: {}]
  %s7 = inlined_call_operand.vmem [shape: f32[16,128], index: 7, kind: output, shape index: {}]
  %s8 = sld [smem:[#allocation0]]
  $region38: #{position_wise_nn.1} parent=0
    _
  %s10 = ssub.s32 1, %s8
  %s11 = scalar_select 0, %s10, %s8
  // Predicated region
  $region2: #{position_wise_nn.1} parent=0 // pred_check
    _
  $region3: #{position_wise_nn.1} parent=0 // pred_check_branch
    %13 = sbr.rel (0) target = $region5
  $region4: #{position_wise_nn.1} parent=0 // pred_region
    _
  $region5: #{position_wise_nn.1} parent=0 // pred_fallthru
    _
  // Predicated region
  $region6: #{position_wise_nn.1} parent=0 // pred_check
    _
  $region7: #{position_wise_nn.1} parent=0 // pred_check_branch
    %15 = sbr.rel (0) target = $region9
  $region8: #{position_wise_nn.1} parent=0 // pred_region
    _
  $region9: #{position_wise_nn.1} parent=0 // pred_fallthru
    _
  // Predicated region
  $region10: #{position_wise_nn.1} parent=0 // pred_check
    _
  $region11: #{position_wise_nn.1} parent=0 // pred_check_branch
    %17 = sbr.rel (0) target = $region13
  $region12: #{position_wise_nn.1} parent=0 // pred_region
    _
  $region13: #{position_wise_nn.1} parent=0 // pred_fallthru
    _
  // Predicated region
  $region14: #{position_wise_nn.1} parent=0 // pred_check
    _
  $region15: #{position_wise_nn.1} parent=0 // pred_check_branch
    %19 = sbr.rel (0) target = $region17
  $region16: #{position_wise_nn.1} parent=0 // pred_region
    _
  $region17: #{position_wise_nn.1} parent=0 // pred_fallthru
    _
  // Predicated region
  $region18: #{position_wise_nn.1} parent=0 // pred_check
    _
  $region19: #{position_wise_nn.1} parent=0 // pred_check_branch
    %21 = sbr.rel (0) target = $region21
  $region20: #{position_wise_nn.1} parent=0 // pred_region
    _
  $region21: #{position_wise_nn.1} parent=0 // pred_fallthru
    _
  // Predicated region
  $region22: #{position_wise_nn.1} parent=0 // pred_check
    _
  $region23: #{position_wise_nn.1} parent=0 // pred_check_branch
    %23 = sbr.rel (0) target = $region25
  $region24: #{position_wise_nn.1} parent=0 // pred_region
    _
  $region25: #{position_wise_nn.1} parent=0 // pred_fallthru
    _
  // Predicated region
  $region26: #{position_wise_nn.1} parent=0 // pred_check
    _
  $region27: #{position_wise_nn.1} parent=0 // pred_check_branch
    %25 = sbr.rel (0) target = $region29
  $region28: #{position_wise_nn.1} parent=0 // pred_region
    _
  $region29: #{position_wise_nn.1} parent=0 // pred_fallthru
    _
  %v26 = vld [vmem:[%s0] sm:$0xff]
  %v27 = vld [vmem:[%s0 + $0x8] sm:$0xff]
  %v28 = vld [vmem:[%s1] sm:$0xff]
  %v29 = vld [vmem:[%s1 + $0x8] sm:$0xff]
  %v30 = vld [vmem:[%s1 + $0x10] sm:$0xff]
  %v31 = vld [vmem:[%s1 + $0x18] sm:$0xff]
  %v32 = vld [vmem:[%s1 + $0x20] sm:$0xff]
  %v33 = vld [vmem:[%s1 + $0x28] sm:$0xff]
  %v34 = vld [vmem:[%s1 + $0x30] sm:$0xff]
  %v35 = vld [vmem:[%s1 + $0x38] sm:$0xff]
  %v36 = vld [vmem:[%s1 + $0x40] sm:$0xff]
  %v37 = vld [vmem:[%s1 + $0x48] sm:$0xff]
  %v38 = vld [vmem:[%s1 + $0x50] sm:$0xff]
  %v39 = vld [vmem:[%s1 + $0x58] sm:$0xff]
  %v40 = vld [vmem:[%s1 + $0x60] sm:$0xff]
  %v41 = vld [vmem:[%s1 + $0x68] sm:$0xff]
  %v42 = vld [vmem:[%s1 + $0x70] sm:$0xff]
  %v43 = vld [vmem:[%s1 + $0x78] sm:$0xff]
  %v44 = vld [vmem:[%s2] sm:$0x1]
  %v46 = vperm.slane %v44, 0
  %48 = vmatpush.msra.mxu0 %v43
  %49 = vmatpush.msra.mxu0 %v42
  %50 = vmatpush.msra.mxu0 %v41
  %51 = vmatpush.msra.mxu0 %v40
  %52 = vmatpush.msra.mxu0 %v39
  %53 = vmatpush.msra.mxu0 %v38
  %54 = vmatpush.msra.mxu0 %v37
  %55 = vmatpush.msra.mxu0 %v36
  %56 = vmatpush.msra.mxu0 %v35
  %57 = vmatpush.msra.mxu0 %v34
  %58 = vmatpush.msra.mxu0 %v33
  %59 = vmatpush.msra.mxu0 %v32
  %60 = vmatpush.msra.mxu0 %v31
  %61 = vmatpush.msra.mxu0 %v30
  %62 = vmatpush.msra.mxu0 %v29
  %63 = vmatpush.msra.mxu0 %v28
  %64 = vmatmul.f32.gmra.mxu0 %v26
  %v65 = vpop.f32.mrf.mxu0
  %v66 = vadd.f32 %v46, %v65
  %67 = vmatmul.f32.gmra.mxu0 %v27
  %v68 = vpop.f32.mrf.mxu0
  %v69 = vadd.f32 %v46, %v68
  %70 = vdwg.mxu0
  %vm71 = vcmp.gt.f32.partialorder %v66, 0.0
  %vm72 = vcmp.gt.f32.partialorder %v69, 0.0
  %v73 = vmul.f32 %v66, 1.442695
  %v74 = vpow.pop %v73
  %v75 = vmul.f32 %v69, 1.442695
  %v76 = vpow.pop %v75
  %v77 = vsub.f32 %v74, 1.0
  %v78 = vsub.f32 %v76, 1.0
  %v79 = vmul.f32 %v77, 1.6732632
  %v80 = vmul.f32 %v78, 1.6732632
  %v81 = vsel %vm71, %v66, %v79
  %v82 = vsel %vm72, %v69, %v80
  %v83 = vmul.f32 %v81, 1.050701
  %v84 = vmul.f32 %v82, 1.050701
  %v85 = vld [vmem:[%s3] sm:$0xff]
  %v86 = vld [vmem:[%s3 + $0x8] sm:$0xff]
  %v87 = vld [vmem:[%s3 + $0x10] sm:$0xff]
  %v88 = vld [vmem:[%s3 + $0x18] sm:$0xff]
  %v89 = vld [vmem:[%s3 + $0x20] sm:$0xff]
  %v90 = vld [vmem:[%s3 + $0x28] sm:$0xff]
  %v91 = vld [vmem:[%s3 + $0x30] sm:$0xff]
  %v92 = vld [vmem:[%s3 + $0x38] sm:$0xff]
  %v93 = vld [vmem:[%s3 + $0x40] sm:$0xff]
  %v94 = vld [vmem:[%s3 + $0x48] sm:$0xff]
  %v95 = vld [vmem:[%s3 + $0x50] sm:$0xff]
  %v96 = vld [vmem:[%s3 + $0x58] sm:$0xff]
  %v97 = vld [vmem:[%s3 + $0x60] sm:$0xff]
  %v98 = vld [vmem:[%s3 + $0x68] sm:$0xff]
  %v99 = vld [vmem:[%s3 + $0x70] sm:$0xff]
  %v100 = vld [vmem:[%s3 + $0x78] sm:$0xff]
  %v101 = vld [vmem:[%s4] sm:$0x1]
  %v103 = vperm.slane %v101, 0
  %105 = vmatpush.msra.mxu0 %v100
  %106 = vmatpush.msra.mxu0 %v99
  %107 = vmatpush.msra.mxu0 %v98
  %108 = vmatpush.msra.mxu0 %v97
  %109 = vmatpush.msra.mxu0 %v96
  %110 = vmatpush.msra.mxu0 %v95
  %111 = vmatpush.msra.mxu0 %v94
  %112 = vmatpush.msra.mxu0 %v93
  %113 = vmatpush.msra.mxu0 %v92
  %114 = vmatpush.msra.mxu0 %v91
  %115 = vmatpush.msra.mxu0 %v90
  %116 = vmatpush.msra.mxu0 %v89
  %117 = vmatpush.msra.mxu0 %v88
  %118 = vmatpush.msra.mxu0 %v87
  %119 = vmatpush.msra.mxu0 %v86
  %120 = vmatpush.msra.mxu0 %v85
  %121 = vmatmul.f32.gmra.mxu0 %v83
  %v122 = vpop.f32.mrf.mxu0
  %v123 = vadd.f32 %v103, %v122
  %124 = vmatmul.f32.gmra.mxu0 %v84
  %v125 = vpop.f32.mrf.mxu0
  %v126 = vadd.f32 %v103, %v125
  %127 = vdwg.mxu0
  %v128 = vadd.f32 %v123, %v26
  %v129 = vadd.f32 %v126, %v27
  %130 = vadd.xlane.f32.xlu0 %v128
  %v131 = vpop.xlane.xlu0 %130
  %132 = vadd.xlane.f32.xlu0 %v129
  %v133 = vpop.xlane.xlu0 %132
  %v134 = vmul.f32 %v128, %v128
  %v135 = vmul.f32 %v129, %v129
  %136 = vadd.xlane.f32.xlu0 %v134
  %v137 = vpop.xlane.xlu0 %136
  %138 = vadd.xlane.f32.xlu0 %v135
  %v139 = vpop.xlane.xlu0 %138
  %v140 = vmul.f32 %v131, 0.03125
  %v141 = vmul.f32 %v133, 0.03125
  %v142 = vmul.f32 %v137, 0.03125
  %v143 = vmul.f32 %v139, 0.03125
  %v144 = vmul.f32 %v140, %v140
  %v145 = vmul.f32 %v141, %v141
  %v146 = vsub.f32 %v142, %v144
  %v147 = vsub.f32 %v143, %v145
  %v148 = vsub.f32 %v128, %v140
  %v149 = vsub.f32 %v129, %v141
  %v150 = vadd.f32 %v146, 1e-06
  %v151 = vadd.f32 %v147, 1e-06
  %v152 = vrsqrt.pop %v150
  %v153 = vmul.f32 %v152, %v150
  %v154 = vmul.f32 %v153, %v152
  %v155 = vmul.f32 0.5, %v154
  %v156 = vsub.f32 1.5, %v155
  %v157 = vmul.f32 %v152, %v156
  %vm158 = vweird.f32 %v150
  %vm159 = vweird.f32 %v152
  %vm160 = vmor %vm158, %vm159
  %v161 = vsel %vm160, %v152, %v157
  %v162 = vrsqrt.pop %v151
  %v163 = vmul.f32 %v162, %v151
  %v164 = vmul.f32 %v163, %v162
  %v165 = vmul.f32 0.5, %v164
  %v166 = vsub.f32 1.5, %v165
  %v167 = vmul.f32 %v162, %v166
  %vm168 = vweird.f32 %v151
  %vm169 = vweird.f32 %v162
  %vm170 = vmor %vm168, %vm169
  %v171 = vsel %vm170, %v162, %v167
  %v172 = vmul.f32 %v148, %v161
  %v173 = vmul.f32 %v149, %v171
  %v174 = vld [vmem:[%s5] sm:$0x1]
  %v176 = vperm.slane %v174, 0
  %v178 = vmul.f32 %v172, %v176
  %v179 = vmul.f32 %v173, %v176
  %v180 = vld [vmem:[%s6] sm:$0x1]
  %v182 = vperm.slane %v180, 0
  %v184 = vadd.f32 %v178, %v182
  %v185 = vadd.f32 %v179, %v182
  %186 = vst [vmem:[%s7] sm:$0xff] %v184
  %187 = vst [vmem:[%s7 + $0x8] sm:$0xff] %v185
  // Predicated region
  $region30: #{position_wise_nn.1} parent=0 // pred_check
    _
  $region31: #{position_wise_nn.1} parent=0 // pred_check_branch
    %189 = sbr.rel (0) target = $region33
  $region32: #{position_wise_nn.1} parent=0 // pred_region
    _
  $region33: #{position_wise_nn.1} parent=0 // pred_fallthru
    _
  // Predicated region
  $region34: #{position_wise_nn.1} parent=0 // pred_check
    _
  $region35: #{position_wise_nn.1} parent=0 // pred_check_branch
    %191 = sbr.rel (0) target = $region37
  $region36: #{position_wise_nn.1} parent=0 // pred_region
    _
  $region37: #{position_wise_nn.1} parent=0 // pred_fallthru
    _

</llo_original>
